<compile_context>
chip_gen: v6e
topology: v6e:2x2x1
jax: 0.10.0
libtpu: 0.0.40
codegen_flags: <defaults>
</compile_context>

<pallas_src>
import jax
import jax.numpy as jnp
from jax.experimental import pallas as pl
from jax.experimental.pallas import tpu as pltpu


def actor_kernel(x_ref, w_emb_ref, w_fts_ref, b_att_ref, w_lr_ref,
                 u_ref, bias_mask_ref, unif_ref,
                 enc_ref, graph_ref, stats_ref):
    BN, S = x_ref.shape
    H = w_emb_ref.shape[1]
    D = w_lr_ref.shape[1] // 2
    B, NN = graph_ref.shape
    N = BN // B

    x = x_ref[...]                                           # (B*N, S)

    # ---------------- GAT encoder (single stack / single head) -------------
    # S is tiny (4): do the embedding as S broadcast FMAs on the VPU instead
    # of an under-filled MXU pass.
    w_emb = w_emb_ref[...]                                   # (S, H)
    emb = x[:, 0:1] * w_emb[0:1, :]
    for k in range(1, S):
        emb = emb + x[:, k:k + 1] * w_emb[k:k + 1, :]        # (B*N, H)
    # TODO(synk): BatchNorm1d after the embedding in the reference GATEncoder
    # is omitted (treated as identity).

    # One MXU pass produces fts and both attention projections:
    #   w_fts_ref = [w_fts | w_fts @ a1^T | w_fts @ a2^T]  -> (H, H+2)
    ff = jnp.dot(emb, w_fts_ref[...],
                 preferred_element_type=jnp.float32)         # (B*N, H+2)
    fts = ff[:, :H]                                          # (B*N, H)
    f1 = ff[:, H:H + 1]                                      # (B*N, 1)
    f2 = ff[:, H + 1:H + 2]                                  # (B*N, 1)

    b_att = b_att_ref[...]                                   # (1, H)

    enc_rows = []
    for b in range(B):                                       # B=2: unroll
        lo, hi = b * N, (b + 1) * N
        fts_b = fts[lo:hi, :]                                # (N, H)
        att = f1[lo:hi, :] + jnp.reshape(f2[lo:hi, :], (1, N))   # (N, N)
        att = jnp.where(att > 0, att, 0.2 * att)             # leaky relu 0.2
        att = att - jnp.max(att, axis=-1, keepdims=True)     # row softmax
        e = jnp.exp(att)
        coefs = e / jnp.sum(e, axis=-1, keepdims=True)       # (N, N)
        vals = jnp.dot(coefs, fts_b,
                       preferred_element_type=jnp.float32)   # (N, H)
        vals = vals + b_att
        out = jnp.where(vals > 0, vals,
                        jnp.exp(jnp.minimum(vals, 0.0)) - 1.0)   # elu
        enc_rows.append(out + emb[lo:hi, :])                 # residual
    enc = jnp.concatenate(enc_rows, axis=0)                  # (B*N, H)
    enc_ref[...] = enc.astype(enc_ref.dtype)

    # ---------------- single-layer decoder ----------------------------------
    # w_lr_ref = [w_l | w_r] -> both projections in one MXU pass.
    dot_lr = jnp.dot(enc, w_lr_ref[...],
                     preferred_element_type=jnp.float32)     # (B*N, 2D)
    u = u_ref[...]                                           # (1, D)

    logit_rows = []
    for b in range(B):
        lo, hi = b * N, (b + 1) * N
        dl = dot_lr[lo:hi, :D]                               # (N, D)
        dr = dot_lr[lo:hi, D:]                               # (N, D)
        pair = jnp.tanh(dl[:, None, :] + dr[None, :, :])     # (N, N, D)
        logits_b = jnp.sum(pair * u, axis=-1)                # (N, N)
        logit_rows.append(jnp.reshape(logits_b, (1, NN)))    # lane-dense row
    logits = jnp.concatenate(logit_rows, axis=0)             # (B, N*N)

    # decoder bias + (-1e8) self-loop diagonal, precomputed as one additive row
    masked = logits + bias_mask_ref[...]                     # (B, N*N)

    # stable softplus and sigmoid (sigmoid = exp(x - softplus(x)):
    # exactly 0 on the masked diagonal, no inf anywhere)
    sp = jnp.maximum(masked, 0.0) + jnp.log(1.0 + jnp.exp(-jnp.abs(masked)))
    prob = jnp.exp(masked - sp)                              # sigmoid(masked)

    # Bernoulli(logits=masked) sampling against host-supplied U[0,1) draws
    graph = (unif_ref[...] < prob).astype(jnp.float32)       # (B, N*N)
    graph_ref[...] = graph

    # binary_cross_entropy_with_logits (no negation, mean over N*N entries)
    bce = sp - masked * graph
    # Bernoulli(logits) entropy = softplus(x) - x * sigmoid(x)
    ent = sp - masked * prob

    inv_nn = 1.0 / float(NN)
    logp = jnp.sum(bce, axis=1, keepdims=True) * inv_nn      # (B, 1)
    entm = jnp.sum(ent, axis=1, keepdims=True) * inv_nn      # (B, 1)
    stats_ref[...] = jnp.concatenate([logp, entm], axis=1)   # (B, 2)


def actor_forward(params, inputs, key):
    """inputs: (B, N, S) float32 -> (encoder_output, graph_gen, log_softmax,
    entropy_regularization), matching the PyTorch Actor.forward outputs."""
    B, N, S = inputs.shape
    H = params['w_emb'].shape[1]
    NN = N * N

    # ---- host-side parameter folding (tiny, done once per call) -----------
    w_fts_ext = jnp.concatenate(
        [params['w_fts'],
         params['w_fts'] @ params['a1'].T,
         params['w_fts'] @ params['a2'].T], axis=1)          # (H, H+2)
    w_lr = jnp.concatenate([params['w_l'], params['w_r']], axis=1)   # (H, 2D)
    eye_flat = jnp.eye(N, dtype=jnp.float32).reshape(1, NN)
    bias_mask = params['dec_bias'][0] - 1e8 * eye_flat       # (1, N*N)

    # lane-dense layouts for the kernel
    x2 = inputs.reshape(B * N, S)
    unif = jax.random.uniform(key, (B, NN), jnp.float32)     # U[0,1) draws

    vmem = pl.BlockSpec(memory_space=pltpu.MemorySpace.VMEM)
    out_shape = (
        jax.ShapeDtypeStruct((B * N, H), jnp.float32),       # encoder output
        jax.ShapeDtypeStruct((B, NN), jnp.float32),          # adjacency (flat)
        jax.ShapeDtypeStruct((B, 2), jnp.float32),           # [logp | entropy]
    )
    enc2, graph2, stats = pl.pallas_call(
        actor_kernel,
        out_shape=out_shape,
        in_specs=[vmem] * 8,
        out_specs=(vmem, vmem, vmem),
    )(x2, params['w_emb'], w_fts_ext, params['b_att'], w_lr,
      params['u'], bias_mask, unif)

    encoder_output = enc2.reshape(B, N, H)
    graph_gen = graph2.reshape(B, N, N)
    log_softmax = stats[:, 0]
    entropy_regularization = stats[:, 1]
    return encoder_output, graph_gen, log_softmax, entropy_regularization


def init_params(key, num_random_sample, hidden_dim, decoder_hidden_dim):
    def glorot(k, shape):
        lim = (6.0 / (shape[0] + shape[-1])) ** 0.5
        return jax.random.uniform(k, shape, jnp.float32, -lim, lim)

    ks = jax.random.split(key, 8)
    S, H, D = num_random_sample, hidden_dim, decoder_hidden_dim
    return dict(
        w_emb=glorot(ks[0], (S, H)),           # node embedding (conv1d k=1)
        w_fts=glorot(ks[1], (H, H)),           # GAT feature transform
        a1=glorot(ks[2], (1, H)),              # GAT attention vector (left)
        a2=glorot(ks[3], (1, H)),              # GAT attention vector (right)
        b_att=jnp.zeros((1, H), jnp.float32),  # GAT bias
        w_l=glorot(ks[4], (H, D)),             # decoder left projection
        w_r=glorot(ks[5], (H, D)),             # decoder right projection
        u=glorot(ks[6], (1, D)),               # decoder scoring vector
        dec_bias=jnp.zeros((1,), jnp.float32),
    )


if __name__ == "__main__":
    # config: batch_size=2, max_length=8, num_random_sample=4,
    #         hidden_dim=16, decoder_hidden_dim=16
    B, N, S, H, D = 2, 8, 4, 16, 16

    key = jax.random.PRNGKey(0)
    k_in, k_p, k_sample = jax.random.split(key, 3)
    inputs = jax.random.normal(k_in, (B, N, S), jnp.float32)
    params = init_params(k_p, S, H, D)

    enc, graph, log_softmax, entropy_reg = actor_forward(params, inputs, k_sample)
    jax.block_until_ready((enc, graph, log_softmax, entropy_reg))

    assert enc.shape == (B, N, H)
    assert graph.shape == (B, N, N)
    assert log_softmax.shape == (B,)
    assert entropy_reg.shape == (B,)
    g = jax.device_get(graph)
    assert ((g == 0.0) | (g == 1.0)).all()                   # (0,1)-adjacency
    assert (g.diagonal(axis1=1, axis2=2) == 0.0).all()       # no self loops
    assert jnp.isfinite(log_softmax).all() and jnp.isfinite(entropy_reg).all()
    assert jnp.isfinite(enc).all()

    print("KERNEL_OK")
</pallas_src>

<mosaic_0001>
module attributes {stable_mosaic.version = 11 : i64} {
  func.func @actor_kernel(%arg0: memref<16x4xf32, #tpu.memory_space<vmem>>, %arg1: memref<4x16xf32, #tpu.memory_space<vmem>>, %arg2: memref<16x18xf32, #tpu.memory_space<vmem>>, %arg3: memref<1x16xf32, #tpu.memory_space<vmem>>, %arg4: memref<16x32xf32, #tpu.memory_space<vmem>>, %arg5: memref<1x16xf32, #tpu.memory_space<vmem>>, %arg6: memref<1x64xf32, #tpu.memory_space<vmem>>, %arg7: memref<2x64xf32, #tpu.memory_space<vmem>>, %arg8: memref<16x16xf32, #tpu.memory_space<vmem>>, %arg9: memref<2x64xf32, #tpu.memory_space<vmem>>, %arg10: memref<2x2xf32, #tpu.memory_space<vmem>>) attributes {dimension_semantics = [], scalar_prefetch = 0 : i64, scratch_operands = 0 : i64, tpu.core_type = #tpu.core_type<tc>} {
    %c0 = arith.constant 0 : index
    %c0_0 = arith.constant 0 : index
    %0 = vector.load %arg0[%c0, %c0_0] : memref<16x4xf32, #tpu.memory_space<vmem>>, vector<16x4xf32>
    %c0_1 = arith.constant 0 : index
    %c0_2 = arith.constant 0 : index
    %1 = vector.load %arg1[%c0_1, %c0_2] : memref<4x16xf32, #tpu.memory_space<vmem>>, vector<4x16xf32>
    %2 = vector.extract_strided_slice %0 {offsets = [0, 0], sizes = [16, 1], strides = [1, 1]} : vector<16x4xf32> to vector<16x1xf32>
    %3 = vector.extract_strided_slice %1 {offsets = [0, 0], sizes = [1, 16], strides = [1, 1]} : vector<4x16xf32> to vector<1x16xf32>
    %4 = vector.broadcast %2 : vector<16x1xf32> to vector<16x16xf32>
    %5 = vector.broadcast %3 : vector<1x16xf32> to vector<16x16xf32>
    %6 = arith.mulf %4, %5 : vector<16x16xf32>
    %7 = vector.extract_strided_slice %0 {offsets = [0, 1], sizes = [16, 1], strides = [1, 1]} : vector<16x4xf32> to vector<16x1xf32>
    %8 = vector.extract_strided_slice %1 {offsets = [1, 0], sizes = [1, 16], strides = [1, 1]} : vector<4x16xf32> to vector<1x16xf32>
    %9 = vector.broadcast %7 : vector<16x1xf32> to vector<16x16xf32>
    %10 = vector.broadcast %8 : vector<1x16xf32> to vector<16x16xf32>
    %11 = arith.mulf %9, %10 : vector<16x16xf32>
    %12 = arith.addf %6, %11 : vector<16x16xf32>
    %13 = vector.extract_strided_slice %0 {offsets = [0, 2], sizes = [16, 1], strides = [1, 1]} : vector<16x4xf32> to vector<16x1xf32>
    %14 = vector.extract_strided_slice %1 {offsets = [2, 0], sizes = [1, 16], strides = [1, 1]} : vector<4x16xf32> to vector<1x16xf32>
    %15 = vector.broadcast %13 : vector<16x1xf32> to vector<16x16xf32>
    %16 = vector.broadcast %14 : vector<1x16xf32> to vector<16x16xf32>
    %17 = arith.mulf %15, %16 : vector<16x16xf32>
    %18 = arith.addf %12, %17 : vector<16x16xf32>
    %19 = vector.extract_strided_slice %0 {offsets = [0, 3], sizes = [16, 1], strides = [1, 1]} : vector<16x4xf32> to vector<16x1xf32>
    %20 = vector.extract_strided_slice %1 {offsets = [3, 0], sizes = [1, 16], strides = [1, 1]} : vector<4x16xf32> to vector<1x16xf32>
    %21 = vector.broadcast %19 : vector<16x1xf32> to vector<16x16xf32>
    %22 = vector.broadcast %20 : vector<1x16xf32> to vector<16x16xf32>
    %23 = arith.mulf %21, %22 : vector<16x16xf32>
    %24 = arith.addf %18, %23 : vector<16x16xf32>
    %c0_3 = arith.constant 0 : index
    %c0_4 = arith.constant 0 : index
    %25 = vector.load %arg2[%c0_3, %c0_4] : memref<16x18xf32, #tpu.memory_space<vmem>>, vector<16x18xf32>
    %cst = arith.constant dense<0.000000e+00> : vector<16x18xf32>
    %26 = tpu.matmul %24, %25, %cst {dimension_numbers = #tpu.dot_dimension_numbers<[1], [0], [0], [1], [0, 0, 1, 1], [], []>} : vector<16x16xf32>, vector<16x18xf32>, vector<16x18xf32> -> vector<16x18xf32>
    %27 = vector.extract_strided_slice %26 {offsets = [0, 0], sizes = [16, 16], strides = [1, 1]} : vector<16x18xf32> to vector<16x16xf32>
    %28 = vector.extract_strided_slice %26 {offsets = [0, 16], sizes = [16, 1], strides = [1, 1]} : vector<16x18xf32> to vector<16x1xf32>
    %29 = vector.extract_strided_slice %26 {offsets = [0, 17], sizes = [16, 1], strides = [1, 1]} : vector<16x18xf32> to vector<16x1xf32>
    %c0_5 = arith.constant 0 : index
    %c0_6 = arith.constant 0 : index
    %30 = vector.load %arg3[%c0_5, %c0_6] : memref<1x16xf32, #tpu.memory_space<vmem>>, vector<1x16xf32>
    %31 = vector.extract_strided_slice %27 {offsets = [0, 0], sizes = [8, 16], strides = [1, 1]} : vector<16x16xf32> to vector<8x16xf32>
    %32 = vector.extract_strided_slice %28 {offsets = [0, 0], sizes = [8, 1], strides = [1, 1]} : vector<16x1xf32> to vector<8x1xf32>
    %33 = vector.extract_strided_slice %29 {offsets = [0, 0], sizes = [8, 1], strides = [1, 1]} : vector<16x1xf32> to vector<8x1xf32>
    %34 = vector.shape_cast %33 : vector<8x1xf32> to vector<1x8xf32>
    %35 = vector.broadcast %32 : vector<8x1xf32> to vector<8x8xf32>
    %36 = vector.broadcast %34 : vector<1x8xf32> to vector<8x8xf32>
    %37 = arith.addf %35, %36 : vector<8x8xf32>
    %cst_7 = arith.constant 0.000000e+00 : f32
    %38 = vector.broadcast %cst_7 : f32 to vector<8x8xf32>
    %39 = arith.cmpf ogt, %37, %38 : vector<8x8xf32>
    %cst_8 = arith.constant 2.000000e-01 : f32
    %40 = vector.broadcast %cst_8 : f32 to vector<8x8xf32>
    %41 = arith.mulf %40, %37 : vector<8x8xf32>
    %42 = arith.select %39, %37, %41 : vector<8x8xi1>, vector<8x8xf32>
    %cst_9 = arith.constant dense<0xFF800000> : vector<8xf32>
    %43 = vector.multi_reduction <maximumf>, %42, %cst_9 [1] : vector<8x8xf32> to vector<8xf32>
    %44 = vector.shape_cast %43 : vector<8xf32> to vector<8x1xf32>
    %45 = vector.broadcast %44 : vector<8x1xf32> to vector<8x8xf32>
    %46 = arith.subf %42, %45 : vector<8x8xf32>
    %47 = math.exp %46 : vector<8x8xf32>
    %cst_10 = arith.constant dense<0.000000e+00> : vector<8xf32>
    %48 = vector.multi_reduction <add>, %47, %cst_10 [1] : vector<8x8xf32> to vector<8xf32>
    %49 = vector.shape_cast %48 : vector<8xf32> to vector<8x1xf32>
    %50 = vector.broadcast %49 : vector<8x1xf32> to vector<8x8xf32>
    %51 = arith.divf %47, %50 : vector<8x8xf32>
    %cst_11 = arith.constant dense<0.000000e+00> : vector<8x16xf32>
    %52 = tpu.matmul %51, %31, %cst_11 {dimension_numbers = #tpu.dot_dimension_numbers<[1], [0], [0], [1], [0, 0, 1, 1], [], []>} : vector<8x8xf32>, vector<8x16xf32>, vector<8x16xf32> -> vector<8x16xf32>
    %53 = vector.broadcast %30 : vector<1x16xf32> to vector<8x16xf32>
    %54 = arith.addf %52, %53 : vector<8x16xf32>
    %cst_12 = arith.constant 0.000000e+00 : f32
    %55 = vector.broadcast %cst_12 : f32 to vector<8x16xf32>
    %56 = arith.cmpf ogt, %54, %55 : vector<8x16xf32>
    %cst_13 = arith.constant 0.000000e+00 : f32
    %57 = vector.broadcast %cst_13 : f32 to vector<8x16xf32>
    %58 = arith.minimumf %54, %57 : vector<8x16xf32>
    %59 = math.exp %58 : vector<8x16xf32>
    %cst_14 = arith.constant 1.000000e+00 : f32
    %60 = vector.broadcast %cst_14 : f32 to vector<8x16xf32>
    %61 = arith.subf %59, %60 : vector<8x16xf32>
    %62 = arith.select %56, %54, %61 : vector<8x16xi1>, vector<8x16xf32>
    %63 = vector.extract_strided_slice %24 {offsets = [0, 0], sizes = [8, 16], strides = [1, 1]} : vector<16x16xf32> to vector<8x16xf32>
    %64 = arith.addf %62, %63 : vector<8x16xf32>
    %65 = vector.extract_strided_slice %27 {offsets = [8, 0], sizes = [8, 16], strides = [1, 1]} : vector<16x16xf32> to vector<8x16xf32>
    %66 = vector.extract_strided_slice %28 {offsets = [8, 0], sizes = [8, 1], strides = [1, 1]} : vector<16x1xf32> to vector<8x1xf32>
    %67 = vector.extract_strided_slice %29 {offsets = [8, 0], sizes = [8, 1], strides = [1, 1]} : vector<16x1xf32> to vector<8x1xf32>
    %68 = vector.shape_cast %67 : vector<8x1xf32> to vector<1x8xf32>
    %69 = vector.broadcast %66 : vector<8x1xf32> to vector<8x8xf32>
    %70 = vector.broadcast %68 : vector<1x8xf32> to vector<8x8xf32>
    %71 = arith.addf %69, %70 : vector<8x8xf32>
    %cst_15 = arith.constant 0.000000e+00 : f32
    %72 = vector.broadcast %cst_15 : f32 to vector<8x8xf32>
    %73 = arith.cmpf ogt, %71, %72 : vector<8x8xf32>
    %cst_16 = arith.constant 2.000000e-01 : f32
    %74 = vector.broadcast %cst_16 : f32 to vector<8x8xf32>
    %75 = arith.mulf %74, %71 : vector<8x8xf32>
    %76 = arith.select %73, %71, %75 : vector<8x8xi1>, vector<8x8xf32>
    %cst_17 = arith.constant dense<0xFF800000> : vector<8xf32>
    %77 = vector.multi_reduction <maximumf>, %76, %cst_17 [1] : vector<8x8xf32> to vector<8xf32>
    %78 = vector.shape_cast %77 : vector<8xf32> to vector<8x1xf32>
    %79 = vector.broadcast %78 : vector<8x1xf32> to vector<8x8xf32>
    %80 = arith.subf %76, %79 : vector<8x8xf32>
    %81 = math.exp %80 : vector<8x8xf32>
    %cst_18 = arith.constant dense<0.000000e+00> : vector<8xf32>
    %82 = vector.multi_reduction <add>, %81, %cst_18 [1] : vector<8x8xf32> to vector<8xf32>
    %83 = vector.shape_cast %82 : vector<8xf32> to vector<8x1xf32>
    %84 = vector.broadcast %83 : vector<8x1xf32> to vector<8x8xf32>
    %85 = arith.divf %81, %84 : vector<8x8xf32>
    %cst_19 = arith.constant dense<0.000000e+00> : vector<8x16xf32>
    %86 = tpu.matmul %85, %65, %cst_19 {dimension_numbers = #tpu.dot_dimension_numbers<[1], [0], [0], [1], [0, 0, 1, 1], [], []>} : vector<8x8xf32>, vector<8x16xf32>, vector<8x16xf32> -> vector<8x16xf32>
    %87 = vector.broadcast %30 : vector<1x16xf32> to vector<8x16xf32>
    %88 = arith.addf %86, %87 : vector<8x16xf32>
    %cst_20 = arith.constant 0.000000e+00 : f32
    %89 = vector.broadcast %cst_20 : f32 to vector<8x16xf32>
    %90 = arith.cmpf ogt, %88, %89 : vector<8x16xf32>
    %cst_21 = arith.constant 0.000000e+00 : f32
    %91 = vector.broadcast %cst_21 : f32 to vector<8x16xf32>
    %92 = arith.minimumf %88, %91 : vector<8x16xf32>
    %93 = math.exp %92 : vector<8x16xf32>
    %cst_22 = arith.constant 1.000000e+00 : f32
    %94 = vector.broadcast %cst_22 : f32 to vector<8x16xf32>
    %95 = arith.subf %93, %94 : vector<8x16xf32>
    %96 = arith.select %90, %88, %95 : vector<8x16xi1>, vector<8x16xf32>
    %97 = vector.extract_strided_slice %24 {offsets = [8, 0], sizes = [8, 16], strides = [1, 1]} : vector<16x16xf32> to vector<8x16xf32>
    %98 = arith.addf %96, %97 : vector<8x16xf32>
    %99 = tpu.concatenate %64, %98 in 0 : vector<8x16xf32>, vector<8x16xf32> -> vector<16x16xf32>
    %c0_23 = arith.constant 0 : index
    %c0_24 = arith.constant 0 : index
    %100 = vector.load %arg8[%c0_23, %c0_24] : memref<16x16xf32, #tpu.memory_space<vmem>>, vector<16x16xf32>
    tpu.vector_store %arg8[%c0_23, %c0_24], %99 {strides = array<i32>} : memref<16x16xf32, #tpu.memory_space<vmem>>, vector<16x16xf32>,
    %c0_25 = arith.constant 0 : index
    %c0_26 = arith.constant 0 : index
    %101 = vector.load %arg4[%c0_25, %c0_26] : memref<16x32xf32, #tpu.memory_space<vmem>>, vector<16x32xf32>
    %cst_27 = arith.constant dense<0.000000e+00> : vector<16x32xf32>
    %102 = tpu.matmul %99, %101, %cst_27 {dimension_numbers = #tpu.dot_dimension_numbers<[1], [0], [0], [1], [0, 0, 1, 1], [], []>} : vector<16x16xf32>, vector<16x32xf32>, vector<16x32xf32> -> vector<16x32xf32>
    %c0_28 = arith.constant 0 : index
    %c0_29 = arith.constant 0 : index
    %103 = vector.load %arg5[%c0_28, %c0_29] : memref<1x16xf32, #tpu.memory_space<vmem>>, vector<1x16xf32>
    %104 = vector.extract_strided_slice %102 {offsets = [0, 0], sizes = [8, 16], strides = [1, 1]} : vector<16x32xf32> to vector<8x16xf32>
    %105 = vector.extract_strided_slice %102 {offsets = [0, 16], sizes = [8, 16], strides = [1, 1]} : vector<16x32xf32> to vector<8x16xf32>
    %106 = vector.shape_cast %104 : vector<8x16xf32> to vector<8x1x16xf32>
    %107 = vector.shape_cast %105 : vector<8x16xf32> to vector<1x8x16xf32>
    %108 = vector.broadcast %106 : vector<8x1x16xf32> to vector<8x8x16xf32>
    %109 = vector.broadcast %107 : vector<1x8x16xf32> to vector<8x8x16xf32>
    %110 = arith.addf %108, %109 : vector<8x8x16xf32>
    %111 = math.tanh %110 : vector<8x8x16xf32>
    %112 = vector.shape_cast %103 : vector<1x16xf32> to vector<1x1x16xf32>
    %113 = vector.broadcast %112 : vector<1x1x16xf32> to vector<8x8x16xf32>
    %114 = arith.mulf %111, %113 : vector<8x8x16xf32>
    %cst_30 = arith.constant dense<0.000000e+00> : vector<8x8xf32>
    %115 = vector.multi_reduction <add>, %114, %cst_30 [2] : vector<8x8x16xf32> to vector<8x8xf32>
    %116 = vector.shape_cast %115 : vector<8x8xf32> to vector<1x64xf32>
    %117 = vector.extract_strided_slice %102 {offsets = [8, 0], sizes = [8, 16], strides = [1, 1]} : vector<16x32xf32> to vector<8x16xf32>
    %118 = vector.extract_strided_slice %102 {offsets = [8, 16], sizes = [8, 16], strides = [1, 1]} : vector<16x32xf32> to vector<8x16xf32>
    %119 = vector.shape_cast %117 : vector<8x16xf32> to vector<8x1x16xf32>
    %120 = vector.shape_cast %118 : vector<8x16xf32> to vector<1x8x16xf32>
    %121 = vector.broadcast %119 : vector<8x1x16xf32> to vector<8x8x16xf32>
    %122 = vector.broadcast %120 : vector<1x8x16xf32> to vector<8x8x16xf32>
    %123 = arith.addf %121, %122 : vector<8x8x16xf32>
    %124 = math.tanh %123 : vector<8x8x16xf32>
    %125 = vector.shape_cast %103 : vector<1x16xf32> to vector<1x1x16xf32>
    %126 = vector.broadcast %125 : vector<1x1x16xf32> to vector<8x8x16xf32>
    %127 = arith.mulf %124, %126 : vector<8x8x16xf32>
    %cst_31 = arith.constant dense<0.000000e+00> : vector<8x8xf32>
    %128 = vector.multi_reduction <add>, %127, %cst_31 [2] : vector<8x8x16xf32> to vector<8x8xf32>
    %129 = vector.shape_cast %128 : vector<8x8xf32> to vector<1x64xf32>
    %130 = tpu.concatenate %116, %129 in 0 : vector<1x64xf32>, vector<1x64xf32> -> vector<2x64xf32>
    %c0_32 = arith.constant 0 : index
    %c0_33 = arith.constant 0 : index
    %131 = vector.load %arg6[%c0_32, %c0_33] : memref<1x64xf32, #tpu.memory_space<vmem>>, vector<1x64xf32>
    %132 = vector.broadcast %131 : vector<1x64xf32> to vector<2x64xf32>
    %133 = arith.addf %130, %132 : vector<2x64xf32>
    %cst_34 = arith.constant 0.000000e+00 : f32
    %134 = vector.broadcast %cst_34 : f32 to vector<2x64xf32>
    %135 = arith.maximumf %133, %134 : vector<2x64xf32>
    %136 = math.absf %133 : vector<2x64xf32>
    %cst_35 = arith.constant 0.000000e+00 : f32
    %137 = vector.broadcast %cst_35 : f32 to vector<2x64xf32>
    %138 = arith.subf %137, %136 : vector<2x64xf32>
    %139 = math.exp %138 : vector<2x64xf32>
    %cst_36 = arith.constant 1.000000e+00 : f32
    %140 = vector.broadcast %cst_36 : f32 to vector<2x64xf32>
    %141 = arith.addf %140, %139 : vector<2x64xf32>
    %142 = math.log %141 : vector<2x64xf32>
    %143 = arith.addf %135, %142 : vector<2x64xf32>
    %144 = arith.subf %133, %143 : vector<2x64xf32>
    %145 = math.exp %144 : vector<2x64xf32>
    %c0_37 = arith.constant 0 : index
    %c0_38 = arith.constant 0 : index
    %146 = vector.load %arg7[%c0_37, %c0_38] : memref<2x64xf32, #tpu.memory_space<vmem>>, vector<2x64xf32>
    %147 = arith.cmpf olt, %146, %145 : vector<2x64xf32>
    %148 = arith.extui %147 : vector<2x64xi1> to vector<2x64xi32>
    %149 = arith.sitofp %148 : vector<2x64xi32> to vector<2x64xf32>
    %c0_39 = arith.constant 0 : index
    %c0_40 = arith.constant 0 : index
    %150 = vector.load %arg9[%c0_39, %c0_40] : memref<2x64xf32, #tpu.memory_space<vmem>>, vector<2x64xf32>
    tpu.vector_store %arg9[%c0_39, %c0_40], %149 {strides = array<i32>} : memref<2x64xf32, #tpu.memory_space<vmem>>, vector<2x64xf32>,
    %151 = arith.mulf %133, %149 : vector<2x64xf32>
    %152 = arith.subf %143, %151 : vector<2x64xf32>
    %153 = arith.mulf %133, %145 : vector<2x64xf32>
    %154 = arith.subf %143, %153 : vector<2x64xf32>
    %cst_41 = arith.constant dense<0.000000e+00> : vector<2xf32>
    %155 = vector.multi_reduction <add>, %152, %cst_41 [1] : vector<2x64xf32> to vector<2xf32>
    %156 = vector.shape_cast %155 : vector<2xf32> to vector<2x1xf32>
    %cst_42 = arith.constant 1.562500e-02 : f32
    %157 = vector.broadcast %cst_42 : f32 to vector<2x1xf32>
    %158 = arith.mulf %156, %157 : vector<2x1xf32>
    %cst_43 = arith.constant dense<0.000000e+00> : vector<2xf32>
    %159 = vector.multi_reduction <add>, %154, %cst_43 [1] : vector<2x64xf32> to vector<2xf32>
    %160 = vector.shape_cast %159 : vector<2xf32> to vector<2x1xf32>
    %cst_44 = arith.constant 1.562500e-02 : f32
    %161 = vector.broadcast %cst_44 : f32 to vector<2x1xf32>
    %162 = arith.mulf %160, %161 : vector<2x1xf32>
    %163 = tpu.concatenate %158, %162 in 1 : vector<2x1xf32>, vector<2x1xf32> -> vector<2x2xf32>
    %c0_45 = arith.constant 0 : index
    %c0_46 = arith.constant 0 : index
    %164 = vector.load %arg10[%c0_45, %c0_46] : memref<2x2xf32, #tpu.memory_space<vmem>>, vector<2x2xf32>
    tpu.vector_store %arg10[%c0_45, %c0_46], %163 {strides = array<i32>} : memref<2x2xf32, #tpu.memory_space<vmem>>, vector<2x2xf32>,
    return
  }
}

</mosaic_0001>

<llo_original>
// kernel: tpu_custom_call.1
$region0: #{tpu_custom_call.1}
  #allocation0 [shape = 'u32[]', space=smem, size = 0x4, offset = 0x4, fixed_abs, tag = 'smem constant byte address 0x4 - core index']
  #allocation1 [shape = 'u32[144,128]{1,0:T(1,128)}', space=vmem, size = 0x12000, scoped, tag = 'internal scratch']
  %s0 = inlined_call_operand.vmem [shape: f32[16,4], index: 0, kind: input, shape index: {}]
  %s1 = inlined_call_operand.vmem [shape: f32[4,16], index: 1, kind: input, shape index: {}]
  %s2 = inlined_call_operand.vmem [shape: f32[16,18], index: 2, kind: input, shape index: {}]
  %s3 = inlined_call_operand.vmem [shape: f32[1,16], index: 3, kind: input, shape index: {}]
  %s4 = inlined_call_operand.hbm [shape: f32[16,32], index: 4, kind: input, shape index: {}]
  %s5 = inlined_call_operand.vmem [shape: f32[1,16], index: 5, kind: input, shape index: {}]
  %s6 = inlined_call_operand.vmem [shape: f32[1,64], index: 6, kind: input, shape index: {}]
  %s7 = inlined_call_operand.vmem [shape: f32[2,64], index: 7, kind: input, shape index: {}]
  %s8 = inlined_call_operand.hbm [shape: f32[16,16], index: 8, kind: output, shape index: {0}]
  %s9 = inlined_call_operand.hbm [shape: f32[2,64], index: 9, kind: output, shape index: {1}]
  %s10 = inlined_call_operand.hbm [shape: f32[2,2], index: 10, kind: output, shape index: {2}]
  %11 = xla_tuple %s8, %s9, %s10
  %s12 = sld [smem:[#allocation0]]
  $region62: #{tpu_custom_call.1} parent=0
    _
  %s14 = ssub.s32 1, %s12
  %s15 = scalar_select 0, %s14, %s12
  $region1: #{tpu_custom_call.1} parent=0
    #allocation2 [shape = 'u8[8192]{0}', space=vmem, size = 0x2000, scoped, tag = 'input window, operand 4, single buffered']
    #allocation3 [shape = 's32[1]{0}', space=sflag, size = 0x4, scoped, tag = 'scoped memory for tpu_custom_call.1']
    #allocation4 [shape = 's32[1]{0}', space=sflag, size = 0x4, scoped, tag = 'scoped memory for tpu_custom_call.1']
    #allocation5 [shape = 'u8[8192]{0}', space=vmem, size = 0x2000, scoped, tag = 'output window, operand 0, single buffered']
    #allocation6 [shape = 'u8[1024]{0}', space=vmem, size = 0x400, scoped, tag = 'output window, operand 1, single buffered']
    #allocation7 [shape = 's32[1]{0}', space=sflag, size = 0x4, scoped, tag = 'scoped memory for tpu_custom_call.1']
    #allocation8 [shape = 'u8[1024]{0}', space=vmem, size = 0x400, scoped, tag = 'output window, operand 2, single buffered']
    %16 = vsyncpa [#allocation3], 0
    %17 = vsyncpa [#allocation4], 0
    %18 = vsyncpa [#allocation7], 0
    // Predicated region
    $region2: #{tpu_custom_call.1} parent=1 // pred_check
      _
    $region3: #{tpu_custom_call.1} parent=1 // pred_check_branch
      %20 = sbr.rel (0) target = $region5
    $region4: #{tpu_custom_call.1} parent=1 // pred_region
      _
    $region5: #{tpu_custom_call.1} parent=1 // pred_fallthru
      _
    // Predicated region
    $region6: #{tpu_custom_call.1} parent=1 // pred_check
      _
    $region7: #{tpu_custom_call.1} parent=1 // pred_check_branch
      %22 = sbr.rel (0) target = $region9
    $region8: #{tpu_custom_call.1} parent=1 // pred_region
      _
    $region9: #{tpu_custom_call.1} parent=1 // pred_fallthru
      _
    // Predicated region
    $region10: #{tpu_custom_call.1} parent=1 // pred_check
      _
    $region11: #{tpu_custom_call.1} parent=1 // pred_check_branch
      %24 = sbr.rel (0) target = $region13
    $region12: #{tpu_custom_call.1} parent=1 // pred_region
      _
    $region13: #{tpu_custom_call.1} parent=1 // pred_fallthru
      _
    // Predicated region
    $region14: #{tpu_custom_call.1} parent=1 // pred_check
      _
    $region15: #{tpu_custom_call.1} parent=1 // pred_check_branch
      %26 = sbr.rel (0) target = $region17
    $region16: #{tpu_custom_call.1} parent=1 // pred_region
      _
    $region17: #{tpu_custom_call.1} parent=1 // pred_fallthru
      _
    // Predicated region
    $region18: #{tpu_custom_call.1} parent=1 // pred_check
      _
    $region19: #{tpu_custom_call.1} parent=1 // pred_check_branch
      %28 = sbr.rel (0) target = $region21
    $region20: #{tpu_custom_call.1} parent=1 // pred_region
      %s30 = ssub.s32 256, 256
      %31 = vsyncadd [#allocation3], %s30
      %s32 = sshll.u32 [#allocation2], 4
      %s33 = int_to_ptr.vmem [resolvable:$true] %s32
      %38 = dma.hbm_to_vmem [thread:$0]  %s4, 256, %s33, [#allocation3], 128, 128, 8
    $region21: #{tpu_custom_call.1} parent=1 // pred_fallthru
      _
    // Predicated region
    $region22: #{tpu_custom_call.1} parent=1 // pred_check
      _
    $region23: #{tpu_custom_call.1} parent=1 // pred_check_branch
      %40 = sbr.rel (0) target = $region25
    $region24: #{tpu_custom_call.1} parent=1 // pred_region
      _
    $region25: #{tpu_custom_call.1} parent=1 // pred_fallthru
      _
    // Predicated region
    $region26: #{tpu_custom_call.1} parent=1 // pred_check
      _
    $region27: #{tpu_custom_call.1} parent=1 // pred_check_branch
      %42 = sbr.rel (0) target = $region29
    $region28: #{tpu_custom_call.1} parent=1 // pred_region
      _
    $region29: #{tpu_custom_call.1} parent=1 // pred_fallthru
      _
    // Predicated region
    $region30: #{tpu_custom_call.1} parent=1 // pred_check
      _
    $region31: #{tpu_custom_call.1} parent=1 // pred_check_branch
      %44 = sbr.rel (0) target = $region33
    $region32: #{tpu_custom_call.1} parent=1 // pred_region
      _
    $region33: #{tpu_custom_call.1} parent=1 // pred_fallthru
      _
    // Predicated region
    $region34: #{tpu_custom_call.1} parent=1 // pred_check
      _
    $region35: #{tpu_custom_call.1} parent=1 // pred_check_branch
      %46 = sbr.rel (0) target = $region37
    $region36: #{tpu_custom_call.1} parent=1 // pred_region
      %47 = dma.done [#allocation3], 256
    $region37: #{tpu_custom_call.1} parent=1 // pred_fallthru
      _
    %v48 = vld [vmem:[%s0] sm:$0xff]
    %v49 = vld [vmem:[%s0 + $0x8] sm:$0xff]
    %v50 = vld [vmem:[%s1] sm:$0xf]
    %52 = vset.pattern.permute.xlu0 0
    %53 = vperm.xlu0 %52, %v48
    %v54 = vpop.permute.xlu0 %53
    %57 = vset.pattern.permute.xlu0 0
    %58 = vperm.xlu0 %57, %v49
    %v59 = vpop.permute.xlu0 %58
    %v61 = vlaneseq
    %v62 = vshrl.u32 %v61, 7
    %v63 = vsub.s32 0, %v62
    %v64 = vrot.slane %v50, %v63
    %v65 = vmul.f32 %v54, %v64
    %v66 = vmul.f32 %v59, %v64
    %67 = vset.pattern.permute.xlu0 1
    %68 = vperm.xlu0 %67, %v48
    %v69 = vpop.permute.xlu0 %68
    %71 = vset.pattern.permute.xlu0 1
    %72 = vperm.xlu0 %71, %v49
    %v73 = vpop.permute.xlu0 %72
    %v75 = vlaneseq
    %v76 = vshrl.u32 %v75, 7
    %v77 = vsub.s32 1, %v76
    %v78 = vrot.slane %v50, %v77
    %v79 = vmul.f32 %v69, %v78
    %v80 = vmul.f32 %v73, %v78
    %v81 = vadd.f32 %v65, %v79
    %v82 = vadd.f32 %v66, %v80
    %83 = vset.pattern.permute.xlu0 2
    %84 = vperm.xlu0 %83, %v48
    %v85 = vpop.permute.xlu0 %84
    %87 = vset.pattern.permute.xlu0 2
    %88 = vperm.xlu0 %87, %v49
    %v89 = vpop.permute.xlu0 %88
    %v91 = vlaneseq
    %v92 = vshrl.u32 %v91, 7
    %v93 = vsub.s32 2, %v92
    %v94 = vrot.slane %v50, %v93
    %v95 = vmul.f32 %v85, %v94
    %v96 = vmul.f32 %v89, %v94
    %v97 = vadd.f32 %v81, %v95
    %v98 = vadd.f32 %v82, %v96
    %99 = vset.pattern.permute.xlu0 3
    %100 = vperm.xlu0 %99, %v48
    %v101 = vpop.permute.xlu0 %100
    %103 = vset.pattern.permute.xlu0 3
    %104 = vperm.xlu0 %103, %v49
    %v105 = vpop.permute.xlu0 %104
    %v107 = vlaneseq
    %v108 = vshrl.u32 %v107, 7
    %v109 = vsub.s32 3, %v108
    %v110 = vrot.slane %v50, %v109
    %v111 = vmul.f32 %v101, %v110
    %v112 = vmul.f32 %v105, %v110
    %v113 = vadd.f32 %v97, %v111
    %v114 = vadd.f32 %v98, %v112
    %v115 = vld [vmem:[%s2] sm:$0xff]
    %v116 = vld [vmem:[%s2 + $0x8] sm:$0xff]
    %vm117 = vcmask 130048
    %v119 = vsel %vm117, %v113, 0
    %v122 = vsel %vm117, %v114, 0
    %124 = vmatprep.subr.mxu0 0.0
    %125 = vmatpush1.msra.mxu0 0.0
    %126 = vmatprep.subr.mxu0 0.0
    %127 = vmatpush1.msra.mxu0 0.0
    %128 = vmatprep.subr.mxu0 0.0
    %129 = vmatpush1.msra.mxu0 0.0
    %130 = vmatprep.subr.mxu0 0.0
    %131 = vmatpush1.msra.mxu0 0.0
    %132 = vmatprep.subr.mxu0 0.0
    %133 = vmatpush1.msra.mxu0 0.0
    %134 = vmatprep.subr.mxu0 0.0
    %135 = vmatpush1.msra.mxu0 0.0
    %136 = vmatprep.subr.mxu0 0.0
    %137 = vmatpush1.msra.mxu0 0.0
    %138 = vmatprep.subr.mxu0 0.0
    %139 = vmatpush1.msra.mxu0 0.0
    %140 = vmatprep.subr.mxu0 0.0
    %141 = vmatpush1.msra.mxu0 0.0
    %142 = vmatprep.subr.mxu0 0.0
    %143 = vmatpush1.msra.mxu0 0.0
    %144 = vmatprep.subr.mxu0 0.0
    %145 = vmatpush1.msra.mxu0 0.0
    %146 = vmatprep.subr.mxu0 0.0
    %147 = vmatpush1.msra.mxu0 0.0
    %148 = vmatprep.subr.mxu0 0.0
    %149 = vmatpush1.msra.mxu0 0.0
    %150 = vmatprep.subr.mxu0 0.0
    %151 = vmatpush1.msra.mxu0 0.0
    %152 = vmatprep.subr.mxu0 0.0
    %153 = vmatpush1.msra.mxu0 %v116
    %154 = vmatprep.subr.mxu0 0.0
    %155 = vmatpush1.msra.mxu0 %v115
    %156 = vmatprep.subr.mxu0 0.0
    %157 = vmatpush2.msra.mxu0 0.0
    %158 = vmatprep.subr.mxu0 0.0
    %159 = vmatpush2.msra.mxu0 0.0
    %160 = vmatprep.subr.mxu0 0.0
    %161 = vmatpush2.msra.mxu0 0.0
    %162 = vmatprep.subr.mxu0 0.0
    %163 = vmatpush2.msra.mxu0 0.0
    %164 = vmatprep.subr.mxu0 0.0
    %165 = vmatpush2.msra.mxu0 0.0
    %166 = vmatprep.subr.mxu0 0.0
    %167 = vmatpush2.msra.mxu0 0.0
    %168 = vmatprep.subr.mxu0 0.0
    %169 = vmatpush2.msra.mxu0 0.0
    %170 = vmatprep.subr.mxu0 0.0
    %171 = vmatpush2.msra.mxu0 0.0
    %172 = vmatprep.subr.mxu0 0.0
    %173 = vmatpush2.msra.mxu0 0.0
    %174 = vmatprep.subr.mxu0 0.0
    %175 = vmatpush2.msra.mxu0 0.0
    %176 = vmatprep.subr.mxu0 0.0
    %177 = vmatpush2.msra.mxu0 0.0
    %178 = vmatprep.subr.mxu0 0.0
    %179 = vmatpush2.msra.mxu0 0.0
    %180 = vmatprep.subr.mxu0 0.0
    %181 = vmatpush2.msra.mxu0 0.0
    %182 = vmatprep.subr.mxu0 0.0
    %183 = vmatpush2.msra.mxu0 0.0
    %184 = vmatprep.subr.mxu0 0.0
    %185 = vmatpush2.msra.mxu0 0.0
    %186 = vmatprep.subr.mxu0 0.0
    %187 = vmatpush2.msra.mxu0 0.0
    %188 = vmatprep.mubr.f32.mxu0 0.0
    %189 = vmatmul.mubr.f32.gmra.mxu0 %v119
    %v190 = vpop.f32.mrf.mxu0
    %v191 = vadd.f32 0.0, %v190
    %v192 = vpop.f32.mrf.mxu0
    %193 = vmatprep.mubr.f32.mxu0 0.0
    %194 = vmatmul.mubr.f32.gmra.mxu0 %v122
    %v195 = vpop.f32.mrf.mxu0
    %v196 = vadd.f32 0.0, %v195
    %v197 = vpop.f32.mrf.mxu0
    %198 = vdwg.mxu0
    %v199 = vld [vmem:[%s3] sm:$0x1]
    %201 = vset.pattern.permute.xlu0 16
    %202 = vperm.xlu0 %201, %v191
    %v203 = vpop.permute.xlu0 %202
    %205 = vset.pattern.permute.xlu0 17
    %206 = vperm.xlu0 %205, %v191
    %v207 = vpop.permute.xlu0 %206
    %v208 = vlaneseq
    %v209 = vand.u32 %v208, 127
    %v210 = vlaneseq
    %v211 = vshrl.u32 %v210, 7
    %v212 = vsub.s32 %v209, %v211
    %v213 = vrot.slane %v207, %v212
    %vm214 = vcmask 1042434
    %v215 = vsel %vm214, %v213, %v213
    %vm216 = vcmask 1043459
    %v217 = vsel %vm216, %v213, %v215
    %vm218 = vcmask 1044484
    %v219 = vsel %vm218, %v213, %v217
    %vm220 = vcmask 1045509
    %v221 = vsel %vm220, %v213, %v219
    %vm222 = vcmask 1046534
    %v223 = vsel %vm222, %v213, %v221
    %vm224 = vcmask 1047559
    %v225 = vsel %vm224, %v213, %v223
    %v227 = vadd.f32 %v203, %v225
    %vm228 = vcmp.gt.f32.partialorder %v227, 0.0
    %v229 = vmul.f32 %v227, 0.2
    %v230 = vsel %vm228, %v227, %v229
    %vm231 = vcmask 64512
    %v232 = vsel %vm231, %v230, -inf
    %233 = vmax.xlane.f32.xlu0 %v232
    %v234 = vpop.xlane.xlu0 %233
    %v235 = vsub.f32 %v230, %v234
    %v236 = vmul.f32 %v235, 1.442695
    %v237 = vpow.pop %v236
    %v238 = vsel %vm231, %v237, 0.0
    %239 = vadd.xlane.f32.xlu0 %v238
    %v240 = vpop.xlane.xlu0 %239
    %v241 = vrcp.pop %v240
    %v242 = vmul.f32 %v237, %v241
    %v244 = vlaneseq
    %v245 = vshrl.u32 %v244, 7
    %v246 = vsub.s32 0, %v245
    %v247 = vrot.slane %v199, %v246
    %v250 = vsel %vm231, %v242, 0
    %252 = vmatprep.subr.mxu0 0.0
    %253 = vmatpush1.msra.mxu0 0.0
    %254 = vmatprep.subr.mxu0 0.0
    %255 = vmatpush1.msra.mxu0 0.0
    %256 = vmatprep.subr.mxu0 0.0
    %257 = vmatpush1.msra.mxu0 0.0
    %258 = vmatprep.subr.mxu0 0.0
    %259 = vmatpush1.msra.mxu0 0.0
    %260 = vmatprep.subr.mxu0 0.0
    %261 = vmatpush1.msra.mxu0 0.0
    %262 = vmatprep.subr.mxu0 0.0
    %263 = vmatpush1.msra.mxu0 0.0
    %264 = vmatprep.subr.mxu0 0.0
    %265 = vmatpush1.msra.mxu0 0.0
    %266 = vmatprep.subr.mxu0 0.0
    %267 = vmatpush1.msra.mxu0 0.0
    %268 = vmatprep.subr.mxu0 0.0
    %269 = vmatpush1.msra.mxu0 0.0
    %270 = vmatprep.subr.mxu0 0.0
    %271 = vmatpush1.msra.mxu0 0.0
    %272 = vmatprep.subr.mxu0 0.0
    %273 = vmatpush1.msra.mxu0 0.0
    %274 = vmatprep.subr.mxu0 0.0
    %275 = vmatpush1.msra.mxu0 0.0
    %276 = vmatprep.subr.mxu0 0.0
    %277 = vmatpush1.msra.mxu0 0.0
    %278 = vmatprep.subr.mxu0 0.0
    %279 = vmatpush1.msra.mxu0 0.0
    %280 = vmatprep.subr.mxu0 0.0
    %281 = vmatpush1.msra.mxu0 0.0
    %282 = vmatprep.subr.mxu0 0.0
    %283 = vmatpush1.msra.mxu0 %v191
    %284 = vmatprep.subr.mxu0 0.0
    %285 = vmatpush2.msra.mxu0 0.0
    %286 = vmatprep.subr.mxu0 0.0
    %287 = vmatpush2.msra.mxu0 0.0
    %288 = vmatprep.subr.mxu0 0.0
    %289 = vmatpush2.msra.mxu0 0.0
    %290 = vmatprep.subr.mxu0 0.0
    %291 = vmatpush2.msra.mxu0 0.0
    %292 = vmatprep.subr.mxu0 0.0
    %293 = vmatpush2.msra.mxu0 0.0
    %294 = vmatprep.subr.mxu0 0.0
    %295 = vmatpush2.msra.mxu0 0.0
    %296 = vmatprep.subr.mxu0 0.0
    %297 = vmatpush2.msra.mxu0 0.0
    %298 = vmatprep.subr.mxu0 0.0
    %299 = vmatpush2.msra.mxu0 0.0
    %300 = vmatprep.subr.mxu0 0.0
    %301 = vmatpush2.msra.mxu0 0.0
    %302 = vmatprep.subr.mxu0 0.0
    %303 = vmatpush2.msra.mxu0 0.0
    %304 = vmatprep.subr.mxu0 0.0
    %305 = vmatpush2.msra.mxu0 0.0
    %306 = vmatprep.subr.mxu0 0.0
    %307 = vmatpush2.msra.mxu0 0.0
    %308 = vmatprep.subr.mxu0 0.0
    %309 = vmatpush2.msra.mxu0 0.0
    %310 = vmatprep.subr.mxu0 0.0
    %311 = vmatpush2.msra.mxu0 0.0
    %312 = vmatprep.subr.mxu0 0.0
    %313 = vmatpush2.msra.mxu0 0.0
    %314 = vmatprep.subr.mxu0 0.0
    %315 = vmatpush2.msra.mxu0 0.0
    %316 = vmatprep.mubr.f32.mxu0 0.0
    %317 = vmatmul.mubr.f32.gmra.mxu0 %v250
    %v318 = vpop.f32.mrf.mxu0
    %v319 = vadd.f32 %v247, %v318
    %v320 = vpop.f32.mrf.mxu0
    %321 = vdwg.mxu0
    %vm322 = vcmp.gt.f32.partialorder %v319, 0.0
    %v323 = vmin.f32 %v319, 0.0
    %v324 = vmul.f32 %v323, 1.442695
    %v325 = vpow.pop %v324
    %v326 = vsub.f32 %v325, 1.0
    %v327 = vsel %vm322, %v319, %v326
    %v328 = vadd.f32 %v327, %v113
    %330 = vset.pattern.permute.xlu0 16
    %331 = vperm.xlu0 %330, %v196
    %v332 = vpop.permute.xlu0 %331
    %334 = vset.pattern.permute.xlu0 17
    %335 = vperm.xlu0 %334, %v196
    %v336 = vpop.permute.xlu0 %335
    %v337 = vlaneseq
    %v338 = vshrl.u32 %v337, 7
    %v339 = vsub.s32 %v209, %v338
    %v340 = vrot.slane %v336, %v339
    %v341 = vsel %vm214, %v340, %v340
    %v342 = vsel %vm216, %v340, %v341
    %v343 = vsel %vm218, %v340, %v342
    %v344 = vsel %vm220, %v340, %v343
    %v345 = vsel %vm222, %v340, %v344
    %v346 = vsel %vm224, %v340, %v345
    %v348 = vadd.f32 %v332, %v346
    %vm349 = vcmp.gt.f32.partialorder %v348, 0.0
    %v350 = vmul.f32 %v348, 0.2
    %v351 = vsel %vm349, %v348, %v350
    %v352 = vsel %vm231, %v351, -inf
    %353 = vmax.xlane.f32.xlu0 %v352
    %v354 = vpop.xlane.xlu0 %353
    %v355 = vsub.f32 %v351, %v354
    %v356 = vmul.f32 %v355, 1.442695
    %v357 = vpow.pop %v356
    %v358 = vsel %vm231, %v357, 0.0
    %359 = vadd.xlane.f32.xlu0 %v358
    %v360 = vpop.xlane.xlu0 %359
    %v361 = vrcp.pop %v360
    %v362 = vmul.f32 %v357, %v361
    %v364 = vsel %vm231, %v362, 0
    %366 = vmatprep.subr.mxu0 0.0
    %367 = vmatpush1.msra.mxu0 0.0
    %368 = vmatprep.subr.mxu0 0.0
    %369 = vmatpush1.msra.mxu0 0.0
    %370 = vmatprep.subr.mxu0 0.0
    %371 = vmatpush1.msra.mxu0 0.0
    %372 = vmatprep.subr.mxu0 0.0
    %373 = vmatpush1.msra.mxu0 0.0
    %374 = vmatprep.subr.mxu0 0.0
    %375 = vmatpush1.msra.mxu0 0.0
    %376 = vmatprep.subr.mxu0 0.0
    %377 = vmatpush1.msra.mxu0 0.0
    %378 = vmatprep.subr.mxu0 0.0
    %379 = vmatpush1.msra.mxu0 0.0
    %380 = vmatprep.subr.mxu0 0.0
    %381 = vmatpush1.msra.mxu0 0.0
    %382 = vmatprep.subr.mxu0 0.0
    %383 = vmatpush1.msra.mxu0 0.0
    %384 = vmatprep.subr.mxu0 0.0
    %385 = vmatpush1.msra.mxu0 0.0
    %386 = vmatprep.subr.mxu0 0.0
    %387 = vmatpush1.msra.mxu0 0.0
    %388 = vmatprep.subr.mxu0 0.0
    %389 = vmatpush1.msra.mxu0 0.0
    %390 = vmatprep.subr.mxu0 0.0
    %391 = vmatpush1.msra.mxu0 0.0
    %392 = vmatprep.subr.mxu0 0.0
    %393 = vmatpush1.msra.mxu0 0.0
    %394 = vmatprep.subr.mxu0 0.0
    %395 = vmatpush1.msra.mxu0 0.0
    %396 = vmatprep.subr.mxu0 0.0
    %397 = vmatpush1.msra.mxu0 %v196
    %398 = vmatprep.subr.mxu0 0.0
    %399 = vmatpush2.msra.mxu0 0.0
    %400 = vmatprep.subr.mxu0 0.0
    %401 = vmatpush2.msra.mxu0 0.0
    %402 = vmatprep.subr.mxu0 0.0
    %403 = vmatpush2.msra.mxu0 0.0
    %404 = vmatprep.subr.mxu0 0.0
    %405 = vmatpush2.msra.mxu0 0.0
    %406 = vmatprep.subr.mxu0 0.0
    %407 = vmatpush2.msra.mxu0 0.0
    %408 = vmatprep.subr.mxu0 0.0
    %409 = vmatpush2.msra.mxu0 0.0
    %410 = vmatprep.subr.mxu0 0.0
    %411 = vmatpush2.msra.mxu0 0.0
    %412 = vmatprep.subr.mxu0 0.0
    %413 = vmatpush2.msra.mxu0 0.0
    %414 = vmatprep.subr.mxu0 0.0
    %415 = vmatpush2.msra.mxu0 0.0
    %416 = vmatprep.subr.mxu0 0.0
    %417 = vmatpush2.msra.mxu0 0.0
    %418 = vmatprep.subr.mxu0 0.0
    %419 = vmatpush2.msra.mxu0 0.0
    %420 = vmatprep.subr.mxu0 0.0
    %421 = vmatpush2.msra.mxu0 0.0
    %422 = vmatprep.subr.mxu0 0.0
    %423 = vmatpush2.msra.mxu0 0.0
    %424 = vmatprep.subr.mxu0 0.0
    %425 = vmatpush2.msra.mxu0 0.0
    %426 = vmatprep.subr.mxu0 0.0
    %427 = vmatpush2.msra.mxu0 0.0
    %428 = vmatprep.subr.mxu0 0.0
    %429 = vmatpush2.msra.mxu0 0.0
    %430 = vmatprep.mubr.f32.mxu0 0.0
    %431 = vmatmul.mubr.f32.gmra.mxu0 %v364
    %v432 = vpop.f32.mrf.mxu0
    %v433 = vadd.f32 %v247, %v432
    %v434 = vpop.f32.mrf.mxu0
    %435 = vdwg.mxu0
    %vm436 = vcmp.gt.f32.partialorder %v433, 0.0
    %v437 = vmin.f32 %v433, 0.0
    %v438 = vmul.f32 %v437, 1.442695
    %v439 = vpow.pop %v438
    %v440 = vsub.f32 %v439, 1.0
    %v441 = vsel %vm436, %v433, %v440
    %v442 = vadd.f32 %v441, %v114
    %443 = vst.msk [vmem:[#allocation5] sm:$0xff] %vm117, %v328
    %444 = vst.msk [vmem:[#allocation5 + $0x8] sm:$0xff] %vm117, %v442
    %v445 = vld [vmem:[#allocation2] sm:$0xff]
    %v446 = vld [vmem:[#allocation2 + $0x8] sm:$0xff]
    %v448 = vsel %vm117, %v328, 0
    %v451 = vsel %vm117, %v442, 0
    %453 = vmatprep.subr.mxu0 0.0
    %454 = vmatpush1.msra.mxu0 0.0
    %455 = vmatprep.subr.mxu0 0.0
    %456 = vmatpush1.msra.mxu0 0.0
    %457 = vmatprep.subr.mxu0 0.0
    %458 = vmatpush1.msra.mxu0 0.0
    %459 = vmatprep.subr.mxu0 0.0
    %460 = vmatpush1.msra.mxu0 0.0
    %461 = vmatprep.subr.mxu0 0.0
    %462 = vmatpush1.msra.mxu0 0.0
    %463 = vmatprep.subr.mxu0 0.0
    %464 = vmatpush1.msra.mxu0 0.0
    %465 = vmatprep.subr.mxu0 0.0
    %466 = vmatpush1.msra.mxu0 0.0
    %467 = vmatprep.subr.mxu0 0.0
    %468 = vmatpush1.msra.mxu0 0.0
    %469 = vmatprep.subr.mxu0 0.0
    %470 = vmatpush1.msra.mxu0 0.0
    %471 = vmatprep.subr.mxu0 0.0
    %472 = vmatpush1.msra.mxu0 0.0
    %473 = vmatprep.subr.mxu0 0.0
    %474 = vmatpush1.msra.mxu0 0.0
    %475 = vmatprep.subr.mxu0 0.0
    %476 = vmatpush1.msra.mxu0 0.0
    %477 = vmatprep.subr.mxu0 0.0
    %478 = vmatpush1.msra.mxu0 0.0
    %479 = vmatprep.subr.mxu0 0.0
    %480 = vmatpush1.msra.mxu0 0.0
    %481 = vmatprep.subr.mxu0 0.0
    %482 = vmatpush1.msra.mxu0 %v446
    %483 = vmatprep.subr.mxu0 0.0
    %484 = vmatpush1.msra.mxu0 %v445
    %485 = vmatprep.subr.mxu0 0.0
    %486 = vmatpush2.msra.mxu0 0.0
    %487 = vmatprep.subr.mxu0 0.0
    %488 = vmatpush2.msra.mxu0 0.0
    %489 = vmatprep.subr.mxu0 0.0
    %490 = vmatpush2.msra.mxu0 0.0
    %491 = vmatprep.subr.mxu0 0.0
    %492 = vmatpush2.msra.mxu0 0.0
    %493 = vmatprep.subr.mxu0 0.0
    %494 = vmatpush2.msra.mxu0 0.0
    %495 = vmatprep.subr.mxu0 0.0
    %496 = vmatpush2.msra.mxu0 0.0
    %497 = vmatprep.subr.mxu0 0.0
    %498 = vmatpush2.msra.mxu0 0.0
    %499 = vmatprep.subr.mxu0 0.0
    %500 = vmatpush2.msra.mxu0 0.0
    %501 = vmatprep.subr.mxu0 0.0
    %502 = vmatpush2.msra.mxu0 0.0
    %503 = vmatprep.subr.mxu0 0.0
    %504 = vmatpush2.msra.mxu0 0.0
    %505 = vmatprep.subr.mxu0 0.0
    %506 = vmatpush2.msra.mxu0 0.0
    %507 = vmatprep.subr.mxu0 0.0
    %508 = vmatpush2.msra.mxu0 0.0
    %509 = vmatprep.subr.mxu0 0.0
    %510 = vmatpush2.msra.mxu0 0.0
    %511 = vmatprep.subr.mxu0 0.0
    %512 = vmatpush2.msra.mxu0 0.0
    %513 = vmatprep.subr.mxu0 0.0
    %514 = vmatpush2.msra.mxu0 0.0
    %515 = vmatprep.subr.mxu0 0.0
    %516 = vmatpush2.msra.mxu0 0.0
    %517 = vmatprep.mubr.f32.mxu0 0.0
    %518 = vmatmul.mubr.f32.gmra.mxu0 %v448
    %v519 = vpop.f32.mrf.mxu0
    %v520 = vadd.f32 0.0, %v519
    %v521 = vpop.f32.mrf.mxu0
    %522 = vmatprep.mubr.f32.mxu0 0.0
    %523 = vmatmul.mubr.f32.gmra.mxu0 %v451
    %v524 = vpop.f32.mrf.mxu0
    %v525 = vadd.f32 0.0, %v524
    %v526 = vpop.f32.mrf.mxu0
    %527 = vdwg.mxu0
    %v528 = vld [vmem:[%s5] sm:$0x1]
    %v530 = vcombine.high %v520, %v520
    %v532 = vunpack.c.l.s4 1966171168
    %v533 = vunpack.c.0.s8 %v532
    %v534 = vlaneseq
    %v535 = vshrl.u32 %v534, 7
    %v536 = vsub.s32 %v533, %v535
    %v537 = vrot.slane %v520, %v536
    %v539 = vunpack.c.l.s4 1966171168
    %v540 = vunpack.c.0.s8 %v539
    %v541 = vlaneseq
    %v542 = vshrl.u32 %v541, 7
    %v543 = vsub.s32 %v540, %v542
    %v544 = vrot.slane %v530, %v543
    %v545 = vcombine.high %v537, %v537
    %v546 = vcombine.high %v544, %v544
    %v548 = vunpack.c.l.s4 1966171168
    %v549 = vunpack.c.0.s8 %v548
    %v550 = vlaneseq
    %v551 = vshrl.u32 %v550, 7
    %v552 = vsub.s32 %v549, %v551
    %v553 = vrot.slane %v537, %v552
    %v555 = vunpack.c.l.s4 1966171168
    %v556 = vunpack.c.0.s8 %v555
    %v557 = vlaneseq
    %v558 = vshrl.u32 %v557, 7
    %v559 = vsub.s32 %v556, %v558
    %v560 = vrot.slane %v544, %v559
    %v562 = vunpack.c.l.s4 1966171168
    %v563 = vunpack.c.0.s8 %v562
    %v564 = vlaneseq
    %v565 = vshrl.u32 %v564, 7
    %v566 = vsub.s32 %v563, %v565
    %v567 = vrot.slane %v545, %v566
    %v569 = vunpack.c.l.s4 1966171168
    %v570 = vunpack.c.0.s8 %v569
    %v571 = vlaneseq
    %v572 = vshrl.u32 %v571, 7
    %v573 = vsub.s32 %v570, %v572
    %v574 = vrot.slane %v546, %v573
    %v575 = vcombine.high %v553, %v553
    %v576 = vcombine.high %v560, %v560
    %v577 = vcombine.high %v567, %v567
    %v578 = vcombine.high %v574, %v574
    %v579 = vlaneseq
    %v580 = vshrl.u32 %v579, 7
    %v581 = vsub.s32 0, %v580
    %v582 = vrot.slane %v553, %v581
    %v583 = vlaneseq
    %v584 = vshrl.u32 %v583, 7
    %v585 = vsub.s32 0, %v584
    %v586 = vrot.slane %v567, %v585
    %v587 = vlaneseq
    %v588 = vshrl.u32 %v587, 7
    %v589 = vsub.s32 0, %v588
    %v590 = vrot.slane %v575, %v589
    %v591 = vlaneseq
    %v592 = vshrl.u32 %v591, 7
    %v593 = vsub.s32 0, %v592
    %v594 = vrot.slane %v577, %v593
    %v595 = vlaneseq
    %v596 = vshrl.u32 %v595, 7
    %v597 = vsub.s32 0, %v596
    %v598 = vrot.slane %v560, %v597
    %v599 = vlaneseq
    %v600 = vshrl.u32 %v599, 7
    %v601 = vsub.s32 0, %v600
    %v602 = vrot.slane %v574, %v601
    %v603 = vlaneseq
    %v604 = vshrl.u32 %v603, 7
    %v605 = vsub.s32 0, %v604
    %v606 = vrot.slane %v576, %v605
    %v607 = vlaneseq
    %v608 = vshrl.u32 %v607, 7
    %v609 = vsub.s32 0, %v608
    %v610 = vrot.slane %v578, %v609
    %619 = vrot.lane.b32.xlu0 %v520, 112
    %v620 = vpop.permute.xlu0 %619
    %v622 = vadd.f32 %v582, %v620
    %v623 = vadd.f32 %v586, %v620
    %v624 = vadd.f32 %v590, %v620
    %v625 = vadd.f32 %v594, %v620
    %v626 = vadd.f32 %v598, %v620
    %v627 = vadd.f32 %v602, %v620
    %v628 = vadd.f32 %v606, %v620
    %v629 = vadd.f32 %v610, %v620
    %v630 = vtanh.pop %v622
    %v631 = vtanh.pop %v623
    %v632 = vtanh.pop %v624
    %v633 = vtanh.pop %v625
    %v634 = vtanh.pop %v626
    %v635 = vtanh.pop %v627
    %v636 = vtanh.pop %v628
    %v637 = vtanh.pop %v629
    %v639 = vlaneseq
    %v640 = vshrl.u32 %v639, 7
    %v641 = vsub.s32 0, %v640
    %v642 = vrot.slane %v528, %v641
    %v644 = vmul.f32 %v630, %v642
    %v645 = vmul.f32 %v631, %v642
    %v646 = vmul.f32 %v632, %v642
    %v647 = vmul.f32 %v633, %v642
    %v648 = vmul.f32 %v634, %v642
    %v649 = vmul.f32 %v635, %v642
    %v650 = vmul.f32 %v636, %v642
    %v651 = vmul.f32 %v637, %v642
    %v652 = vsel %vm117, %v644, 0.0
    %653 = vadd.xlane.f32.xlu0 %v652
    %v654 = vpop.xlane.xlu0 %653
    %v655 = vsel %vm117, %v645, 0.0
    %656 = vadd.xlane.f32.xlu0 %v655
    %v657 = vpop.xlane.xlu0 %656
    %v658 = vsel %vm117, %v646, 0.0
    %659 = vadd.xlane.f32.xlu0 %v658
    %v660 = vpop.xlane.xlu0 %659
    %v661 = vsel %vm117, %v647, 0.0
    %662 = vadd.xlane.f32.xlu0 %v661
    %v663 = vpop.xlane.xlu0 %662
    %v664 = vsel %vm117, %v648, 0.0
    %665 = vadd.xlane.f32.xlu0 %v664
    %v666 = vpop.xlane.xlu0 %665
    %v667 = vsel %vm117, %v649, 0.0
    %668 = vadd.xlane.f32.xlu0 %v667
    %v669 = vpop.xlane.xlu0 %668
    %v670 = vsel %vm117, %v650, 0.0
    %671 = vadd.xlane.f32.xlu0 %v670
    %v672 = vpop.xlane.xlu0 %671
    %v673 = vsel %vm117, %v651, 0.0
    %674 = vadd.xlane.f32.xlu0 %v673
    %v675 = vpop.xlane.xlu0 %674
    %v677 = vcombine.high %v525, %v525
    %v679 = vunpack.c.l.s4 1966171168
    %v680 = vunpack.c.0.s8 %v679
    %v681 = vlaneseq
    %v682 = vshrl.u32 %v681, 7
    %v683 = vsub.s32 %v680, %v682
    %v684 = vrot.slane %v525, %v683
    %v686 = vunpack.c.l.s4 1966171168
    %v687 = vunpack.c.0.s8 %v686
    %v688 = vlaneseq
    %v689 = vshrl.u32 %v688, 7
    %v690 = vsub.s32 %v687, %v689
    %v691 = vrot.slane %v677, %v690
    %v692 = vcombine.high %v684, %v684
    %v693 = vcombine.high %v691, %v691
    %v695 = vunpack.c.l.s4 1966171168
    %v696 = vunpack.c.0.s8 %v695
    %v697 = vlaneseq
    %v698 = vshrl.u32 %v697, 7
    %v699 = vsub.s32 %v696, %v698
    %v700 = vrot.slane %v684, %v699
    %v702 = vunpack.c.l.s4 1966171168
    %v703 = vunpack.c.0.s8 %v702
    %v704 = vlaneseq
    %v705 = vshrl.u32 %v704, 7
    %v706 = vsub.s32 %v703, %v705
    %v707 = vrot.slane %v691, %v706
    %v709 = vunpack.c.l.s4 1966171168
    %v710 = vunpack.c.0.s8 %v709
    %v711 = vlaneseq
    %v712 = vshrl.u32 %v711, 7
    %v713 = vsub.s32 %v710, %v712
    %v714 = vrot.slane %v692, %v713
    %v716 = vunpack.c.l.s4 1966171168
    %v717 = vunpack.c.0.s8 %v716
    %v718 = vlaneseq
    %v719 = vshrl.u32 %v718, 7
    %v720 = vsub.s32 %v717, %v719
    %v721 = vrot.slane %v693, %v720
    %v722 = vcombine.high %v700, %v700
    %v723 = vcombine.high %v707, %v707
    %v724 = vcombine.high %v714, %v714
    %v725 = vcombine.high %v721, %v721
    %v726 = vlaneseq
    %v727 = vshrl.u32 %v726, 7
    %v728 = vsub.s32 0, %v727
    %v729 = vrot.slane %v700, %v728
    %v730 = vlaneseq
    %v731 = vshrl.u32 %v730, 7
    %v732 = vsub.s32 0, %v731
    %v733 = vrot.slane %v714, %v732
    %v734 = vlaneseq
    %v735 = vshrl.u32 %v734, 7
    %v736 = vsub.s32 0, %v735
    %v737 = vrot.slane %v722, %v736
    %v738 = vlaneseq
    %v739 = vshrl.u32 %v738, 7
    %v740 = vsub.s32 0, %v739
    %v741 = vrot.slane %v724, %v740
    %v742 = vlaneseq
    %v743 = vshrl.u32 %v742, 7
    %v744 = vsub.s32 0, %v743
    %v745 = vrot.slane %v707, %v744
    %v746 = vlaneseq
    %v747 = vshrl.u32 %v746, 7
    %v748 = vsub.s32 0, %v747
    %v749 = vrot.slane %v721, %v748
    %v750 = vlaneseq
    %v751 = vshrl.u32 %v750, 7
    %v752 = vsub.s32 0, %v751
    %v753 = vrot.slane %v723, %v752
    %v754 = vlaneseq
    %v755 = vshrl.u32 %v754, 7
    %v756 = vsub.s32 0, %v755
    %v757 = vrot.slane %v725, %v756
    %766 = vrot.lane.b32.xlu0 %v525, 112
    %v767 = vpop.permute.xlu0 %766
    %v769 = vadd.f32 %v729, %v767
    %v770 = vadd.f32 %v733, %v767
    %v771 = vadd.f32 %v737, %v767
    %v772 = vadd.f32 %v741, %v767
    %v773 = vadd.f32 %v745, %v767
    %v774 = vadd.f32 %v749, %v767
    %v775 = vadd.f32 %v753, %v767
    %v776 = vadd.f32 %v757, %v767
    %v777 = vtanh.pop %v769
    %v778 = vtanh.pop %v770
    %v779 = vtanh.pop %v771
    %v780 = vtanh.pop %v772
    %v781 = vtanh.pop %v773
    %v782 = vtanh.pop %v774
    %v783 = vtanh.pop %v775
    %v784 = vtanh.pop %v776
    %v785 = vmul.f32 %v777, %v642
    %v786 = vmul.f32 %v778, %v642
    %v787 = vmul.f32 %v779, %v642
    %v788 = vmul.f32 %v780, %v642
    %v789 = vmul.f32 %v781, %v642
    %v790 = vmul.f32 %v782, %v642
    %v791 = vmul.f32 %v783, %v642
    %v792 = vmul.f32 %v784, %v642
    %v793 = vsel %vm117, %v785, 0.0
    %794 = vadd.xlane.f32.xlu0 %v793
    %v795 = vpop.xlane.xlu0 %794
    %v796 = vsel %vm117, %v786, 0.0
    %797 = vadd.xlane.f32.xlu0 %v796
    %v798 = vpop.xlane.xlu0 %797
    %v799 = vsel %vm117, %v787, 0.0
    %800 = vadd.xlane.f32.xlu0 %v799
    %v801 = vpop.xlane.xlu0 %800
    %v802 = vsel %vm117, %v788, 0.0
    %803 = vadd.xlane.f32.xlu0 %v802
    %v804 = vpop.xlane.xlu0 %803
    %v805 = vsel %vm117, %v789, 0.0
    %806 = vadd.xlane.f32.xlu0 %v805
    %v807 = vpop.xlane.xlu0 %806
    %v808 = vsel %vm117, %v790, 0.0
    %809 = vadd.xlane.f32.xlu0 %v808
    %v810 = vpop.xlane.xlu0 %809
    %v811 = vsel %vm117, %v791, 0.0
    %812 = vadd.xlane.f32.xlu0 %v811
    %v813 = vpop.xlane.xlu0 %812
    %v814 = vsel %vm117, %v792, 0.0
    %815 = vadd.xlane.f32.xlu0 %v814
    %v816 = vpop.xlane.xlu0 %815
    %v825 = vlaneseq
    %v826 = vshrl.u32 %v825, 7
    %v827 = vsub.s32 %v209, %v826
    %v828 = vrot.slane %v654, %v827
    %v829 = vadd.s32 %v209, 4294967288
    %v830 = vlaneseq
    %v831 = vshrl.u32 %v830, 7
    %v832 = vsub.s32 %v829, %v831
    %v833 = vrot.slane %v657, %v832
    %vm834 = vcmask 130112
    %v835 = vsel %vm834, %v833, %v828
    %v836 = vadd.s32 %v209, 4294967280
    %v837 = vlaneseq
    %v838 = vshrl.u32 %v837, 7
    %v839 = vsub.s32 %v836, %v838
    %v840 = vrot.slane %v660, %v839
    %vm841 = vcmask 195712
    %v842 = vsel %vm841, %v840, %v835
    %v843 = vadd.s32 %v209, 4294967272
    %v844 = vlaneseq
    %v845 = vshrl.u32 %v844, 7
    %v846 = vsub.s32 %v843, %v845
    %v847 = vrot.slane %v663, %v846
    %vm848 = vcmask 261312
    %v849 = vsel %vm848, %v847, %v842
    %v850 = vadd.s32 %v209, 4294967264
    %v851 = vlaneseq
    %v852 = vshrl.u32 %v851, 7
    %v853 = vsub.s32 %v850, %v852
    %v854 = vrot.slane %v666, %v853
    %vm855 = vcmask 326912
    %v856 = vsel %vm855, %v854, %v849
    %v857 = vadd.s32 %v209, 4294967256
    %v858 = vlaneseq
    %v859 = vshrl.u32 %v858, 7
    %v860 = vsub.s32 %v857, %v859
    %v861 = vrot.slane %v669, %v860
    %vm862 = vcmask 392512
    %v863 = vsel %vm862, %v861, %v856
    %v864 = vadd.s32 %v209, 4294967248
    %v865 = vlaneseq
    %v866 = vshrl.u32 %v865, 7
    %v867 = vsub.s32 %v864, %v866
    %v868 = vrot.slane %v672, %v867
    %vm869 = vcmask 458112
    %v870 = vsel %vm869, %v868, %v863
    %v871 = vadd.s32 %v209, 4294967240
    %v872 = vlaneseq
    %v873 = vshrl.u32 %v872, 7
    %v874 = vsub.s32 %v871, %v873
    %v875 = vrot.slane %v675, %v874
    %vm876 = vcmask 523712
    %v877 = vsel %vm876, %v875, %v870
    %v887 = vlaneseq
    %v888 = vshrl.u32 %v887, 7
    %v889 = vsub.s32 %v209, %v888
    %v890 = vrot.slane %v795, %v889
    %v891 = vlaneseq
    %v892 = vshrl.u32 %v891, 7
    %v893 = vsub.s32 %v829, %v892
    %v894 = vrot.slane %v798, %v893
    %v895 = vsel %vm834, %v894, %v890
    %v896 = vlaneseq
    %v897 = vshrl.u32 %v896, 7
    %v898 = vsub.s32 %v836, %v897
    %v899 = vrot.slane %v801, %v898
    %v900 = vsel %vm841, %v899, %v895
    %v901 = vlaneseq
    %v902 = vshrl.u32 %v901, 7
    %v903 = vsub.s32 %v843, %v902
    %v904 = vrot.slane %v804, %v903
    %v905 = vsel %vm848, %v904, %v900
    %v906 = vlaneseq
    %v907 = vshrl.u32 %v906, 7
    %v908 = vsub.s32 %v850, %v907
    %v909 = vrot.slane %v807, %v908
    %v910 = vsel %vm855, %v909, %v905
    %v911 = vlaneseq
    %v912 = vshrl.u32 %v911, 7
    %v913 = vsub.s32 %v857, %v912
    %v914 = vrot.slane %v810, %v913
    %v915 = vsel %vm862, %v914, %v910
    %v916 = vlaneseq
    %v917 = vshrl.u32 %v916, 7
    %v918 = vsub.s32 %v864, %v917
    %v919 = vrot.slane %v813, %v918
    %v920 = vsel %vm869, %v919, %v915
    %v921 = vlaneseq
    %v922 = vshrl.u32 %v921, 7
    %v923 = vsub.s32 %v871, %v922
    %v924 = vrot.slane %v816, %v923
    %v925 = vsel %vm876, %v924, %v920
    %vm927 = vcmask 1040384
    %v928 = vsel %vm927, %v877, %v925
    %v929 = vld [vmem:[%s6] sm:$0x1]
    %v931 = vlaneseq
    %v932 = vshrl.u32 %v931, 7
    %v933 = vsub.s32 0, %v932
    %v934 = vrot.slane %v929, %v933
    %v936 = vadd.f32 %v928, %v934
    %v937 = vmax.f32 %v936, 0.0
    %v938 = vand.u32 2147483647, %v936
    %v939 = vsub.f32 0.0, %v938
    %v940 = vmul.f32 %v939, 1.442695
    %v941 = vpow.pop %v940
    %v942 = vadd.f32 %v941, 1.0
    %v943 = vlog2.pop %v942
    %v944 = vmul.f32 %v943, 0.6931472
    %v945 = vadd.f32 %v937, %v944
    %v946 = vsub.f32 %v936, %v945
    %v947 = vmul.f32 %v946, 1.442695
    %v948 = vpow.pop %v947
    %v949 = vld [vmem:[%s7] sm:$0x3]
    %vm950 = vcmp.lt.f32.partialorder %v949, %v948
    %v951 = vsel %vm950, 1, 0
    %v952 = vcvt.s32.f32 %v951
    %vm953 = vcmask 517120
    %954 = vst.msk [vmem:[#allocation6] sm:$0x3] %vm953, %v952
    %v955 = vmul.f32 %v936, %v952
    %v956 = vsub.f32 %v945, %v955
    %v957 = vmul.f32 %v936, %v948
    %v958 = vsub.f32 %v945, %v957
    %v959 = vsel %vm953, %v956, 0.0
    %960 = vadd.xlane.f32.xlu0 %v959
    %v961 = vpop.xlane.xlu0 %960
    %v962 = vmul.f32 %v961, 0.015625
    %v963 = vsel %vm953, %v958, 0.0
    %964 = vadd.xlane.f32.xlu0 %v963
    %v965 = vpop.xlane.xlu0 %964
    %v966 = vmul.f32 %v965, 0.015625
    %vm967 = vcmask 7168
    %v968 = vsel %vm967, %v962, %v966
    %vm969 = vcmask 9216
    %970 = vst.msk [vmem:[#allocation8] sm:$0x3] %vm969, %v968
    // Predicated region
    $region38: #{tpu_custom_call.1} parent=1 // pred_check
      _
    $region39: #{tpu_custom_call.1} parent=1 // pred_check_branch
      %972 = sbr.rel (0) target = $region41
    $region40: #{tpu_custom_call.1} parent=1 // pred_region
      %s974 = ssub.s32 256, 256
      %975 = vsyncadd [#allocation4], %s974
      %s976 = sshll.u32 [#allocation5], 4
      %s977 = int_to_ptr.vmem [resolvable:$true] %s976
      %982 = dma.vmem_to_hbm [thread:$0]  %s977, 256, %s8, [#allocation4], 128, 128, 8
    $region41: #{tpu_custom_call.1} parent=1 // pred_fallthru
      _
    // Predicated region
    $region42: #{tpu_custom_call.1} parent=1 // pred_check
      _
    $region43: #{tpu_custom_call.1} parent=1 // pred_check_branch
      %984 = sbr.rel (0) target = $region45
    $region44: #{tpu_custom_call.1} parent=1 // pred_region
      %s986 = ssub.s32 32, 32
      %987 = vsyncadd [#allocation7], %s986
      %s989 = sshll.u32 [#allocation6], 4
      %s990 = int_to_ptr.vmem [resolvable:$true] %s989
      %992 = dma.vmem_to_hbm [thread:$0]  %s990, 32, %s9, [#allocation7]
    $region45: #{tpu_custom_call.1} parent=1 // pred_fallthru
      _
    // Predicated region
    $region46: #{tpu_custom_call.1} parent=1 // pred_check
      _
    $region47: #{tpu_custom_call.1} parent=1 // pred_check_branch
      %994 = sbr.rel (0) target = $region49
    $region48: #{tpu_custom_call.1} parent=1 // pred_region
      %s996 = ssub.s32 32, 32
      %997 = vsyncadd [#allocation7], %s996
      %s999 = sshll.u32 [#allocation8], 4
      %s1000 = int_to_ptr.vmem [resolvable:$true] %s999
      %1002 = dma.vmem_to_hbm [thread:$0]  %s1000, 32, %s10, [#allocation7]
    $region49: #{tpu_custom_call.1} parent=1 // pred_fallthru
      _
    // Predicated region
    $region50: #{tpu_custom_call.1} parent=1 // pred_check
      _
    $region51: #{tpu_custom_call.1} parent=1 // pred_check_branch
      %1004 = sbr.rel (0) target = $region53
    $region52: #{tpu_custom_call.1} parent=1 // pred_region
      %1005 = dma.done [#allocation4], 256
    $region53: #{tpu_custom_call.1} parent=1 // pred_fallthru
      _
    // Predicated region
    $region54: #{tpu_custom_call.1} parent=1 // pred_check
      _
    $region55: #{tpu_custom_call.1} parent=1 // pred_check_branch
      %1007 = sbr.rel (0) target = $region57
    $region56: #{tpu_custom_call.1} parent=1 // pred_region
      %1008 = dma.done [#allocation7], 32
    $region57: #{tpu_custom_call.1} parent=1 // pred_fallthru
      _
    // Predicated region
    $region58: #{tpu_custom_call.1} parent=1 // pred_check
      _
    $region59: #{tpu_custom_call.1} parent=1 // pred_check_branch
      %1010 = sbr.rel (0) target = $region61
    $region60: #{tpu_custom_call.1} parent=1 // pred_region
      %1011 = dma.done [#allocation7], 32
    $region61: #{tpu_custom_call.1} parent=1 // pred_fallthru
      _
    %1012 = vsyncpa [#allocation3], 1
    %1013 = vsyncpa [#allocation4], 1
    %1014 = vsyncpa [#allocation7], 1

</llo_original>
